<compile_context>
chip_gen: v5e
topology: v5e:2x2
jax: 0.10.0
libtpu: 0.0.40
codegen_flags: <defaults>
</compile_context>

<pallas_src>
import numpy as np

import jax
import jax.numpy as jnp
from jax.experimental import pallas as pl
from jax.experimental.pallas import tpu as pltpu


def _gconv1d_kernel(x_ref, w_ref, b_ref, o_ref):
    # x_ref: (B, L*C_in)  w_ref: (L*C_in, C_out*T_out)  b_ref: (1, C_out*T_out)
    # o_ref: (B, C_out*T_out)
    acc = jnp.dot(x_ref[...], w_ref[...], preferred_element_type=jnp.float32)
    acc = acc + b_ref[...]                      # bias broadcast over batch rows
    o_ref[...] = jnp.maximum(acc, 0.0).astype(o_ref.dtype)


def prepare_global_conv1d_params(weight, bias, seq_len):
    """One-time (per weight update) prep — hoisted out of the per-call path.

    weight: (C_out, C_in, K) [PyTorch Conv1d layout]; bias: (C_out,).
    Returns:
      w_toep: (L*C_in, C_out*T_out) with
              w_toep[l*C_in + ci, c*T_out + t] = W[c, ci, l - t]  (0 <= l-t < K, else 0)
      b_flat: (1, C_out*T_out) with b_flat[0, c*T_out + t] = bias[c]
    """
    C_out, C_in, K = weight.shape
    L = int(seq_len)
    T_out = L - K + 1

    # Static indicator (NumPy, depends only on shapes) — constant-folded if
    # this ever runs under jit.  I[k, l, t] = 1.0 iff l - t == k.
    k_idx = np.arange(K)[:, None, None]
    l_idx = np.arange(L)[None, :, None]
    t_idx = np.arange(T_out)[None, None, :]
    ind = (l_idx - t_idx == k_idx).astype(np.float32)          # (K, L, T_out)

    # Single einsum: w_toep[l, ci, c, t] = sum_k W[c, ci, k] * I[k, l, t]
    w_toep = jnp.einsum(
        "cik,klt->lict", weight.astype(jnp.float32), jnp.asarray(ind)
    ).reshape(L * C_in, C_out * T_out)

    b_flat = jnp.broadcast_to(
        bias.astype(jnp.float32)[:, None], (C_out, T_out)
    ).reshape(1, C_out * T_out)
    return w_toep, b_flat


@jax.jit
def global_conv1d(x, w_toep, b_flat):
    """Per-call forward.  x: (B, L, C_in); w_toep/b_flat from prepare_*.

    Returns (B, C_out * T_out), identical to PyTorch GlobalConv1D.forward.
    """
    B, L, C_in = x.shape
    N = w_toep.shape[1]                          # C_out * T_out

    # Free, row-major bitcast: x_flat[b, l*C_in + ci] = x[b, l, ci]
    x_flat = x.reshape(B, L * C_in)

    flops = 2 * B * (L * C_in) * N
    bytes_accessed = 4 * (x_flat.size + w_toep.size + b_flat.size + B * N)

    return pl.pallas_call(
        _gconv1d_kernel,
        out_shape=jax.ShapeDtypeStruct((B, N), x.dtype),
        # Gridless: whole arrays resident in VMEM, single-buffered weights.
        in_specs=[
            pl.BlockSpec(memory_space=pltpu.MemorySpace.VMEM),
            pl.BlockSpec(memory_space=pltpu.MemorySpace.VMEM),
            pl.BlockSpec(memory_space=pltpu.MemorySpace.VMEM),
        ],
        out_specs=pl.BlockSpec(memory_space=pltpu.MemorySpace.VMEM),
        cost_estimate=pl.CostEstimate(
            flops=flops, transcendentals=0, bytes_accessed=bytes_accessed
        ),
    )(x_flat, w_toep, b_flat)


def _reference(x, weight, bias):
    # Pure-JAX reference of the PyTorch forward (direct shifted-slice conv).
    B, L, C_in = x.shape
    C_out, _, K = weight.shape
    T_out = L - K + 1
    out = jnp.zeros((B, C_out, T_out), jnp.float32)
    for k in range(K):
        out = out + jnp.einsum(
            "blc,oc->bol", x[:, k : k + T_out, :], weight[:, :, k]
        )
    out = out + bias[None, :, None]
    return jnp.maximum(out.reshape(B, -1), 0.0)


if __name__ == "__main__":
    # Params: gcn_input_dims=4, global_cnn_dims=8, num_stats=5, seq len L=16.
    B, L, C_in, C_out, K = 2, 16, 4, 8, 5

    key = jax.random.PRNGKey(0)
    kx, kw, kb = jax.random.split(key, 3)

    x = jax.random.normal(kx, (B, L, C_in), dtype=jnp.float32)
    # Deterministic init matching reinit(): U(-lim, lim), lim = sqrt(1/(K*C_in)).
    lim = (1.0 / (K * C_in)) ** 0.5
    weight = jax.random.uniform(kw, (C_out, C_in, K), jnp.float32, -lim, lim)
    bias = jax.random.uniform(kb, (C_out,), jnp.float32, -lim, lim)

    # One-time weight prep (hoisted out of the per-call jitted path).
    w_toep, b_flat = prepare_global_conv1d_params(weight, bias, L)
    jax.block_until_ready((w_toep, b_flat))

    y = global_conv1d(x, w_toep, b_flat)
    jax.block_until_ready(y)

    y_ref = _reference(x, weight, bias)
    assert y.shape == (B, C_out * (L - K + 1)), y.shape
    assert jnp.allclose(y, y_ref, atol=1e-5, rtol=1e-5), float(
        jnp.max(jnp.abs(y - y_ref))
    )
    print("KERNEL_OK")
</pallas_src>

<mosaic_0001>
module attributes {stable_mosaic.version = 11 : i64} {
  func.func @_gconv1d_kernel(%arg0: memref<2x64xf32, #tpu.memory_space<vmem>>, %arg1: memref<64x96xf32, #tpu.memory_space<vmem>>, %arg2: memref<1x96xf32, #tpu.memory_space<vmem>>, %arg3: memref<2x96xf32, #tpu.memory_space<vmem>>) attributes {dimension_semantics = [], scalar_prefetch = 0 : i64, scratch_operands = 0 : i64, tpu.core_type = #tpu.core_type<tc>} {
    %c0 = arith.constant 0 : index
    %c0_0 = arith.constant 0 : index
    %0 = vector.load %arg0[%c0, %c0_0] : memref<2x64xf32, #tpu.memory_space<vmem>>, vector<2x64xf32>
    %c0_1 = arith.constant 0 : index
    %c0_2 = arith.constant 0 : index
    %1 = vector.load %arg1[%c0_1, %c0_2] : memref<64x96xf32, #tpu.memory_space<vmem>>, vector<64x96xf32>
    %cst = arith.constant dense<0.000000e+00> : vector<2x96xf32>
    %2 = tpu.matmul %0, %1, %cst {dimension_numbers = #tpu.dot_dimension_numbers<[1], [0], [0], [1], [0, 0, 1, 1], [], []>} : vector<2x64xf32>, vector<64x96xf32>, vector<2x96xf32> -> vector<2x96xf32>
    %c0_3 = arith.constant 0 : index
    %c0_4 = arith.constant 0 : index
    %3 = vector.load %arg2[%c0_3, %c0_4] : memref<1x96xf32, #tpu.memory_space<vmem>>, vector<1x96xf32>
    %4 = vector.broadcast %3 : vector<1x96xf32> to vector<2x96xf32>
    %5 = arith.addf %2, %4 : vector<2x96xf32>
    %cst_5 = arith.constant 0.000000e+00 : f32
    %6 = vector.broadcast %cst_5 : f32 to vector<2x96xf32>
    %7 = arith.maximumf %5, %6 : vector<2x96xf32>
    %c0_6 = arith.constant 0 : index
    %c0_7 = arith.constant 0 : index
    %8 = vector.load %arg3[%c0_6, %c0_7] : memref<2x96xf32, #tpu.memory_space<vmem>>, vector<2x96xf32>
    tpu.vector_store %arg3[%c0_6, %c0_7], %7 {strides = array<i32>} : memref<2x96xf32, #tpu.memory_space<vmem>>, vector<2x96xf32>,
    return
  }
}

</mosaic_0001>

<llo_original>
// kernel: global_conv1d.1
$region0: #{global_conv1d.1}
  #allocation0 [shape = 'u32[]', space=smem, size = 0x4, offset = 0x4, fixed_abs, tag = 'smem constant byte address 0x4 - core index']
  #allocation1 [shape = 'u32[72,128]{1,0:T(1,128)}', space=vmem, size = 0x9000, scoped, tag = 'internal scratch']
  %s0 = inlined_call_operand.vmem [shape: f32[2,64], index: 0, kind: input, shape index: {}]
  %s1 = inlined_call_operand.vmem [shape: f32[64,96], index: 1, kind: input, shape index: {}]
  %s2 = inlined_call_operand.vmem [shape: f32[1,96], index: 2, kind: input, shape index: {}]
  %s3 = inlined_call_operand.hbm [shape: f32[2,96], index: 3, kind: output, shape index: {}]
  %s4 = sld [smem:[#allocation0]]
  $region22: #{global_conv1d.1} parent=0
    _
  %s6 = ssub.s32 1, %s4
  %s7 = scalar_select 0, %s6, %s4
  $region1: #{global_conv1d.1} parent=0
    #allocation2 [shape = 'u8[1024]{0}', space=vmem, size = 0x400, scoped, tag = 'output window, operand 0, single buffered']
    #allocation3 [shape = 's32[1]{0}', space=sflag, size = 0x4, scoped, tag = 'scoped memory for global_conv1d.1']
    %8 = vsyncpa [#allocation3], 0
    // Predicated region
    $region2: #{global_conv1d.1} parent=1 // pred_check
      _
    $region3: #{global_conv1d.1} parent=1 // pred_check_branch
      %10 = sbr.rel (0) target = $region5
    $region4: #{global_conv1d.1} parent=1 // pred_region
      _
    $region5: #{global_conv1d.1} parent=1 // pred_fallthru
      _
    // Predicated region
    $region6: #{global_conv1d.1} parent=1 // pred_check
      _
    $region7: #{global_conv1d.1} parent=1 // pred_check_branch
      %12 = sbr.rel (0) target = $region9
    $region8: #{global_conv1d.1} parent=1 // pred_region
      _
    $region9: #{global_conv1d.1} parent=1 // pred_fallthru
      _
    // Predicated region
    $region10: #{global_conv1d.1} parent=1 // pred_check
      _
    $region11: #{global_conv1d.1} parent=1 // pred_check_branch
      %14 = sbr.rel (0) target = $region13
    $region12: #{global_conv1d.1} parent=1 // pred_region
      _
    $region13: #{global_conv1d.1} parent=1 // pred_fallthru
      _
    %v15 = vld [vmem:[%s0] sm:$0x3]
    %v16 = vld [vmem:[%s1] sm:$0xff]
    %v17 = vld [vmem:[%s1 + $0x8] sm:$0xff]
    %v18 = vld [vmem:[%s1 + $0x10] sm:$0xff]
    %v19 = vld [vmem:[%s1 + $0x18] sm:$0xff]
    %v20 = vld [vmem:[%s1 + $0x20] sm:$0xff]
    %v21 = vld [vmem:[%s1 + $0x28] sm:$0xff]
    %v22 = vld [vmem:[%s1 + $0x30] sm:$0xff]
    %v23 = vld [vmem:[%s1 + $0x38] sm:$0xff]
    %v24 = vld [vmem:[%s2] sm:$0x1]
    %v26 = vperm.slane %v24, 0
    %vm28 = vcmask 523264
    %v30 = vsel %vm28, %v15, 0
    %32 = vmatpush.msra.mxu0 0.0
    %33 = vmatpush.msra.mxu0 0.0
    %34 = vmatpush.msra.mxu0 0.0
    %35 = vmatpush.msra.mxu0 0.0
    %36 = vmatpush.msra.mxu0 0.0
    %37 = vmatpush.msra.mxu0 0.0
    %38 = vmatpush.msra.mxu0 0.0
    %39 = vmatpush.msra.mxu0 0.0
    %40 = vmatpush.msra.mxu0 %v23
    %41 = vmatpush.msra.mxu0 %v22
    %42 = vmatpush.msra.mxu0 %v21
    %43 = vmatpush.msra.mxu0 %v20
    %44 = vmatpush.msra.mxu0 %v19
    %45 = vmatpush.msra.mxu0 %v18
    %46 = vmatpush.msra.mxu0 %v17
    %47 = vmatpush.msra.mxu0 %v16
    %48 = vmatmul.f32.gmra.mxu0 %v30
    %v49 = vpop.f32.mrf.mxu0
    %v50 = vadd.f32 %v26, %v49
    %51 = vdwg.mxu0
    %v52 = vmax.f32 %v50, 0.0
    %vm53 = vcmask 779264
    %54 = vst.msk [vmem:[#allocation2] sm:$0x3] %vm53, %v52
    // Predicated region
    $region14: #{global_conv1d.1} parent=1 // pred_check
      _
    $region15: #{global_conv1d.1} parent=1 // pred_check_branch
      %56 = sbr.rel (0) target = $region17
    $region16: #{global_conv1d.1} parent=1 // pred_region
      %58 = vsyncadd [#allocation3], 0
      %s60 = sshll.u32 [#allocation2], 4
      %s61 = int_to_ptr.vmem [resolvable:$true] %s60
      %s62 = sshll.u32 %s3, 4
      %s63 = int_to_ptr.hbm [resolvable:$true] %s62
      %65 = dma.vmem_to_hbm [thread:$0]  %s61, 32, %s63, [#allocation3]
    $region17: #{global_conv1d.1} parent=1 // pred_fallthru
      _
    // Predicated region
    $region18: #{global_conv1d.1} parent=1 // pred_check
      _
    $region19: #{global_conv1d.1} parent=1 // pred_check_branch
      %67 = sbr.rel (0) target = $region21
    $region20: #{global_conv1d.1} parent=1 // pred_region
      %69 = dma.done [#allocation3], 32
    $region21: #{global_conv1d.1} parent=1 // pred_fallthru
      _
    %70 = vsyncpa [#allocation3], 1

</llo_original>
